<compile_context>
chip_gen: v7x
topology: tpu7x:2x2x1
jax: 0.10.0
libtpu: 0.0.40
codegen_flags: <defaults>
</compile_context>

<pallas_src>
import math

import jax
import jax.numpy as jnp
from jax import lax
from jax.experimental import pallas as pl
from jax.experimental.pallas import tpu as pltpu

_EPS = 1e-8
# dot_general dimension numbers for  x @ W.T  (contract last dim of both).
_NT_DIMS = (((1,), (1,)), ((), ()))


def _fusion_kernel(
    z1_ref, z2_ref, noise_ref,
    w1_ref, w2_ref,
    wm1_ref, bm1_ref, wl1_ref, bl1_ref,
    wm2_ref, bm2_ref, wl2_ref, bl2_ref,
    g1_ref, g2_ref, hmean_ref, hlogvar_ref,
):
    f32 = jnp.float32

    # ---- h1 = z1 @ w1, h2 = z2 @ w2  (MXU, f32 accumulate) ----
    h1 = jnp.dot(z1_ref[...], w1_ref[...], preferred_element_type=f32)
    h2 = jnp.dot(z2_ref[...], w2_ref[...], preferred_element_type=f32)

    def linear(x, w_ref, b_ref):
        # PyTorch Linear: y = x @ W.T + b, W is (out, in) -> contract dim 1 of both.
        y = lax.dot_general(x, w_ref[...], dimension_numbers=_NT_DIMS,
                            preferred_element_type=f32)
        return y + b_ref[...]

    mu1 = linear(h1, wm1_ref, bm1_ref)
    lv1 = linear(h1, wl1_ref, bl1_ref)
    mu2 = linear(h2, wm2_ref, bm2_ref)
    lv2 = linear(h2, wl2_ref, bl2_ref)

    # ---- Product of Experts over {prior N(0,1), expert1, expert2} ----
    # prior: mu = 0, logvar = 0  ->  T0 = 1 / (exp(0) + eps + eps)
    t0 = 1.0 / (1.0 + _EPS + _EPS)
    t1 = 1.0 / (jnp.exp(lv1) + _EPS + _EPS)
    t2 = 1.0 / (jnp.exp(lv2) + _EPS + _EPS)
    t_sum = t0 + t1 + t2
    inv_t_sum = 1.0 / t_sum                      # == pd_var
    pd_mu = (mu1 * t1 + mu2 * t2) * inv_t_sum    # prior contributes 0 * t0
    pd_logvar = jnp.log(inv_t_sum + _EPS)

    # ---- reparametrize: h = noise * std + mu ----
    h = noise_ref[...] * jnp.exp(0.5 * pd_logvar) + pd_mu

    # ---- g1 = h @ w1.T, g2 = h @ w2.T ----
    g1 = lax.dot_general(h, w1_ref[...], dimension_numbers=_NT_DIMS,
                         preferred_element_type=f32)
    g2 = lax.dot_general(h, w2_ref[...], dimension_numbers=_NT_DIMS,
                         preferred_element_type=f32)

    g1_ref[...] = g1.astype(g1_ref.dtype)
    g2_ref[...] = g2.astype(g2_ref.dtype)
    hmean_ref[...] = pd_mu.astype(hmean_ref.dtype)
    hlogvar_ref[...] = pd_logvar.astype(hlogvar_ref.dtype)


def fusion_forward(z1, z2, noise, params, *, tile_b=256):
    """z1, z2: (B, dim_latents) f32; noise: (B, h_dim) f32 (standard normal).

    params: dict with w1, w2 (dim_latents, h_dim); wm1, wl1, wm2, wl2 (h_dim, h_dim)
            in PyTorch (out, in) layout; bm1, bl1, bm2, bl2 (h_dim,).
    Returns (g1, g2, h_mean, h_logvar).
    """
    B, L = z1.shape
    H = params["w1"].shape[1]

    # Batch tiling: one row-tile per grid step (double-buffered, 'parallel' axis).
    TB = min(tile_b, B)
    pad = (-B) % TB
    if pad:
        z1 = jnp.pad(z1, ((0, pad), (0, 0)))
        z2 = jnp.pad(z2, ((0, pad), (0, 0)))
        noise = jnp.pad(noise, ((0, pad), (0, 0)))
    Bp = B + pad
    grid = (Bp // TB,)

    row_spec_L = pl.BlockSpec((TB, L), lambda i: (i, 0))
    row_spec_H = pl.BlockSpec((TB, H), lambda i: (i, 0))
    w_lh_spec = pl.BlockSpec((L, H), lambda i: (0, 0))   # resident weight
    w_hh_spec = pl.BlockSpec((H, H), lambda i: (0, 0))   # resident weight
    b_spec = pl.BlockSpec((1, H), lambda i: (0, 0))      # resident bias row

    out_shape = (
        jax.ShapeDtypeStruct((Bp, L), jnp.float32),  # g1
        jax.ShapeDtypeStruct((Bp, L), jnp.float32),  # g2
        jax.ShapeDtypeStruct((Bp, H), jnp.float32),  # h_mean
        jax.ShapeDtypeStruct((Bp, H), jnp.float32),  # h_logvar
    )

    g1, g2, h_mean, h_logvar = pl.pallas_call(
        _fusion_kernel,
        out_shape=out_shape,
        grid=grid,
        in_specs=[
            row_spec_L,            # z1
            row_spec_L,            # z2
            row_spec_H,            # noise
            w_lh_spec,             # w1
            w_lh_spec,             # w2
            w_hh_spec, b_spec,     # dg1_encoder_mu (W, b)
            w_hh_spec, b_spec,     # dg1_encoder_logvar
            w_hh_spec, b_spec,     # dg2_encoder_mu
            w_hh_spec, b_spec,     # dg2_encoder_logvar
        ],
        out_specs=(
            pl.BlockSpec((TB, L), lambda i: (i, 0)),
            pl.BlockSpec((TB, L), lambda i: (i, 0)),
            pl.BlockSpec((TB, H), lambda i: (i, 0)),
            pl.BlockSpec((TB, H), lambda i: (i, 0)),
        ),
        compiler_params=pltpu.CompilerParams(
            dimension_semantics=("parallel",),
        ),
    )(
        z1, z2, noise,
        params["w1"], params["w2"],
        params["wm1"], params["bm1"].reshape(1, H),
        params["wl1"], params["bl1"].reshape(1, H),
        params["wm2"], params["bm2"].reshape(1, H),
        params["wl2"], params["bl2"].reshape(1, H),
    )

    if pad:
        g1, g2, h_mean, h_logvar = g1[:B], g2[:B], h_mean[:B], h_logvar[:B]
    return g1, g2, h_mean, h_logvar


def _xavier_uniform(key, shape):
    fan_out, fan_in = shape
    bound = math.sqrt(6.0 / (fan_in + fan_out))
    return jax.random.uniform(key, shape, minval=-bound, maxval=bound,
                              dtype=jnp.float32)


def init_params(key, h_dim, dim_latents):
    ks = jax.random.split(key, 6)
    return {
        "w1": _xavier_uniform(ks[0], (dim_latents, h_dim)),
        "w2": _xavier_uniform(ks[1], (dim_latents, h_dim)),
        "wm1": _xavier_uniform(ks[2], (h_dim, h_dim)),
        "bm1": jnp.zeros((h_dim,), jnp.float32),
        "wl1": _xavier_uniform(ks[3], (h_dim, h_dim)),
        "bl1": jnp.zeros((h_dim,), jnp.float32),
        "wm2": _xavier_uniform(ks[4], (h_dim, h_dim)),
        "bm2": jnp.zeros((h_dim,), jnp.float32),
        "wl2": _xavier_uniform(ks[5], (h_dim, h_dim)),
        "bl2": jnp.zeros((h_dim,), jnp.float32),
    }


def _reference(z1, z2, noise, p):
    h1 = z1 @ p["w1"]
    h2 = z2 @ p["w2"]
    mu1 = h1 @ p["wm1"].T + p["bm1"]
    lv1 = h1 @ p["wl1"].T + p["bl1"]
    mu2 = h2 @ p["wm2"].T + p["bm2"]
    lv2 = h2 @ p["wl2"].T + p["bl2"]
    mu = jnp.stack([jnp.zeros_like(mu1), mu1, mu2], axis=0)
    logvar = jnp.stack([jnp.zeros_like(lv1), lv1, lv2], axis=0)
    var = jnp.exp(logvar) + _EPS
    T = 1.0 / (var + _EPS)
    pd_mu = jnp.sum(mu * T, axis=0) / jnp.sum(T, axis=0)
    pd_var = 1.0 / jnp.sum(T, axis=0)
    pd_logvar = jnp.log(pd_var + _EPS)
    h = noise * jnp.exp(0.5 * pd_logvar) + pd_mu
    return h @ p["w1"].T, h @ p["w2"].T, pd_mu, pd_logvar


if __name__ == "__main__":
    batch = 8
    h_dim = 32
    dim_latents = 64

    key = jax.random.PRNGKey(0)
    k_p, k_z1, k_z2, k_n = jax.random.split(key, 4)

    params = init_params(k_p, h_dim, dim_latents)
    z1 = jax.random.normal(k_z1, (batch, dim_latents), dtype=jnp.float32)
    z2 = jax.random.normal(k_z2, (batch, dim_latents), dtype=jnp.float32)
    noise = jax.random.normal(k_n, (batch, h_dim), dtype=jnp.float32)

    g1, g2, h_mean, h_logvar = fusion_forward(z1, z2, noise, params)
    (g1, g2, h_mean, h_logvar) = jax.block_until_ready((g1, g2, h_mean, h_logvar))

    rg1, rg2, rmu, rlv = _reference(z1, z2, noise, params)
    assert g1.shape == (batch, dim_latents) and g2.shape == (batch, dim_latents)
    assert h_mean.shape == (batch, h_dim) and h_logvar.shape == (batch, h_dim)
    assert jnp.allclose(g1, rg1, atol=1e-5, rtol=1e-5)
    assert jnp.allclose(g2, rg2, atol=1e-5, rtol=1e-5)
    assert jnp.allclose(h_mean, rmu, atol=1e-5, rtol=1e-5)
    assert jnp.allclose(h_logvar, rlv, atol=1e-5, rtol=1e-5)

    print("KERNEL_OK")
</pallas_src>

<mosaic_0001>
module attributes {stable_mosaic.version = 11 : i64} {
  func.func @_fusion_kernel(%arg0: i32, %arg1: memref<8x64xf32, #tpu.memory_space<vmem>>, %arg2: memref<8x64xf32, #tpu.memory_space<vmem>>, %arg3: memref<8x32xf32, #tpu.memory_space<vmem>>, %arg4: memref<64x32xf32, #tpu.memory_space<vmem>>, %arg5: memref<64x32xf32, #tpu.memory_space<vmem>>, %arg6: memref<32x32xf32, #tpu.memory_space<vmem>>, %arg7: memref<1x32xf32, #tpu.memory_space<vmem>>, %arg8: memref<32x32xf32, #tpu.memory_space<vmem>>, %arg9: memref<1x32xf32, #tpu.memory_space<vmem>>, %arg10: memref<32x32xf32, #tpu.memory_space<vmem>>, %arg11: memref<1x32xf32, #tpu.memory_space<vmem>>, %arg12: memref<32x32xf32, #tpu.memory_space<vmem>>, %arg13: memref<1x32xf32, #tpu.memory_space<vmem>>, %arg14: memref<8x64xf32, #tpu.memory_space<vmem>>, %arg15: memref<8x64xf32, #tpu.memory_space<vmem>>, %arg16: memref<8x32xf32, #tpu.memory_space<vmem>>, %arg17: memref<8x32xf32, #tpu.memory_space<vmem>>) attributes {dimension_semantics = [#tpu.dimension_semantics<parallel>], iteration_bounds = array<i64: 1>, scalar_prefetch = 0 : i64, scratch_operands = 0 : i64, tpu.core_type = #tpu.core_type<tc>, window_params = [{transform_indices = @transform_0, window_bounds = array<i64: 8, 64>}, {transform_indices = @transform_1, window_bounds = array<i64: 8, 64>}, {transform_indices = @transform_2, window_bounds = array<i64: 8, 32>}, {pipeline_mode = #tpu.pipeline_mode<synchronous>, transform_indices = @transform_3, window_bounds = array<i64: 64, 32>}, {pipeline_mode = #tpu.pipeline_mode<synchronous>, transform_indices = @transform_4, window_bounds = array<i64: 64, 32>}, {pipeline_mode = #tpu.pipeline_mode<synchronous>, transform_indices = @transform_5, window_bounds = array<i64: 32, 32>}, {pipeline_mode = #tpu.pipeline_mode<synchronous>, transform_indices = @transform_6, window_bounds = array<i64: 1, 32>}, {pipeline_mode = #tpu.pipeline_mode<synchronous>, transform_indices = @transform_7, window_bounds = array<i64: 32, 32>}, {pipeline_mode = #tpu.pipeline_mode<synchronous>, transform_indices = @transform_8, window_bounds = array<i64: 1, 32>}, {pipeline_mode = #tpu.pipeline_mode<synchronous>, transform_indices = @transform_9, window_bounds = array<i64: 32, 32>}, {pipeline_mode = #tpu.pipeline_mode<synchronous>, transform_indices = @transform_10, window_bounds = array<i64: 1, 32>}, {pipeline_mode = #tpu.pipeline_mode<synchronous>, transform_indices = @transform_11, window_bounds = array<i64: 32, 32>}, {pipeline_mode = #tpu.pipeline_mode<synchronous>, transform_indices = @transform_12, window_bounds = array<i64: 1, 32>}, {transform_indices = @transform_13, window_bounds = array<i64: 8, 64>}, {transform_indices = @transform_14, window_bounds = array<i64: 8, 64>}, {transform_indices = @transform_15, window_bounds = array<i64: 8, 32>}, {transform_indices = @transform_16, window_bounds = array<i64: 8, 32>}]} {
    %c0 = arith.constant 0 : index
    %c0_0 = arith.constant 0 : index
    %0 = vector.load %arg1[%c0, %c0_0] : memref<8x64xf32, #tpu.memory_space<vmem>>, vector<8x64xf32>
    %c0_1 = arith.constant 0 : index
    %c0_2 = arith.constant 0 : index
    %1 = vector.load %arg4[%c0_1, %c0_2] : memref<64x32xf32, #tpu.memory_space<vmem>>, vector<64x32xf32>
    %cst = arith.constant dense<0.000000e+00> : vector<8x32xf32>
    %2 = tpu.matmul %0, %1, %cst {dimension_numbers = #tpu.dot_dimension_numbers<[1], [0], [0], [1], [0, 0, 1, 1], [], []>} : vector<8x64xf32>, vector<64x32xf32>, vector<8x32xf32> -> vector<8x32xf32>
    %c0_3 = arith.constant 0 : index
    %c0_4 = arith.constant 0 : index
    %3 = vector.load %arg2[%c0_3, %c0_4] : memref<8x64xf32, #tpu.memory_space<vmem>>, vector<8x64xf32>
    %c0_5 = arith.constant 0 : index
    %c0_6 = arith.constant 0 : index
    %4 = vector.load %arg5[%c0_5, %c0_6] : memref<64x32xf32, #tpu.memory_space<vmem>>, vector<64x32xf32>
    %cst_7 = arith.constant dense<0.000000e+00> : vector<8x32xf32>
    %5 = tpu.matmul %3, %4, %cst_7 {dimension_numbers = #tpu.dot_dimension_numbers<[1], [0], [0], [1], [0, 0, 1, 1], [], []>} : vector<8x64xf32>, vector<64x32xf32>, vector<8x32xf32> -> vector<8x32xf32>
    %c0_8 = arith.constant 0 : index
    %c0_9 = arith.constant 0 : index
    %6 = vector.load %arg6[%c0_8, %c0_9] : memref<32x32xf32, #tpu.memory_space<vmem>>, vector<32x32xf32>
    %cst_10 = arith.constant dense<0.000000e+00> : vector<8x32xf32>
    %7 = tpu.matmul %2, %6, %cst_10 {dimension_numbers = #tpu.dot_dimension_numbers<[1], [1], [0], [0], [0, 0, 1, 0], [], []>} : vector<8x32xf32>, vector<32x32xf32>, vector<8x32xf32> -> vector<8x32xf32>
    %c0_11 = arith.constant 0 : index
    %c0_12 = arith.constant 0 : index
    %8 = vector.load %arg7[%c0_11, %c0_12] : memref<1x32xf32, #tpu.memory_space<vmem>>, vector<1x32xf32>
    %9 = vector.broadcast %8 : vector<1x32xf32> to vector<8x32xf32>
    %10 = arith.addf %7, %9 : vector<8x32xf32>
    %c0_13 = arith.constant 0 : index
    %c0_14 = arith.constant 0 : index
    %11 = vector.load %arg8[%c0_13, %c0_14] : memref<32x32xf32, #tpu.memory_space<vmem>>, vector<32x32xf32>
    %cst_15 = arith.constant dense<0.000000e+00> : vector<8x32xf32>
    %12 = tpu.matmul %2, %11, %cst_15 {dimension_numbers = #tpu.dot_dimension_numbers<[1], [1], [0], [0], [0, 0, 1, 0], [], []>} : vector<8x32xf32>, vector<32x32xf32>, vector<8x32xf32> -> vector<8x32xf32>
    %c0_16 = arith.constant 0 : index
    %c0_17 = arith.constant 0 : index
    %13 = vector.load %arg9[%c0_16, %c0_17] : memref<1x32xf32, #tpu.memory_space<vmem>>, vector<1x32xf32>
    %14 = vector.broadcast %13 : vector<1x32xf32> to vector<8x32xf32>
    %15 = arith.addf %12, %14 : vector<8x32xf32>
    %c0_18 = arith.constant 0 : index
    %c0_19 = arith.constant 0 : index
    %16 = vector.load %arg10[%c0_18, %c0_19] : memref<32x32xf32, #tpu.memory_space<vmem>>, vector<32x32xf32>
    %cst_20 = arith.constant dense<0.000000e+00> : vector<8x32xf32>
    %17 = tpu.matmul %5, %16, %cst_20 {dimension_numbers = #tpu.dot_dimension_numbers<[1], [1], [0], [0], [0, 0, 1, 0], [], []>} : vector<8x32xf32>, vector<32x32xf32>, vector<8x32xf32> -> vector<8x32xf32>
    %c0_21 = arith.constant 0 : index
    %c0_22 = arith.constant 0 : index
    %18 = vector.load %arg11[%c0_21, %c0_22] : memref<1x32xf32, #tpu.memory_space<vmem>>, vector<1x32xf32>
    %19 = vector.broadcast %18 : vector<1x32xf32> to vector<8x32xf32>
    %20 = arith.addf %17, %19 : vector<8x32xf32>
    %c0_23 = arith.constant 0 : index
    %c0_24 = arith.constant 0 : index
    %21 = vector.load %arg12[%c0_23, %c0_24] : memref<32x32xf32, #tpu.memory_space<vmem>>, vector<32x32xf32>
    %cst_25 = arith.constant dense<0.000000e+00> : vector<8x32xf32>
    %22 = tpu.matmul %5, %21, %cst_25 {dimension_numbers = #tpu.dot_dimension_numbers<[1], [1], [0], [0], [0, 0, 1, 0], [], []>} : vector<8x32xf32>, vector<32x32xf32>, vector<8x32xf32> -> vector<8x32xf32>
    %c0_26 = arith.constant 0 : index
    %c0_27 = arith.constant 0 : index
    %23 = vector.load %arg13[%c0_26, %c0_27] : memref<1x32xf32, #tpu.memory_space<vmem>>, vector<1x32xf32>
    %24 = vector.broadcast %23 : vector<1x32xf32> to vector<8x32xf32>
    %25 = arith.addf %22, %24 : vector<8x32xf32>
    %26 = math.exp %15 : vector<8x32xf32>
    %cst_28 = arith.constant 9.99999993E-9 : f32
    %27 = vector.broadcast %cst_28 : f32 to vector<8x32xf32>
    %28 = arith.addf %26, %27 : vector<8x32xf32>
    %cst_29 = arith.constant 9.99999993E-9 : f32
    %29 = vector.broadcast %cst_29 : f32 to vector<8x32xf32>
    %30 = arith.addf %28, %29 : vector<8x32xf32>
    %cst_30 = arith.constant 1.000000e+00 : f32
    %31 = vector.broadcast %cst_30 : f32 to vector<8x32xf32>
    %32 = arith.divf %31, %30 : vector<8x32xf32>
    %33 = math.exp %25 : vector<8x32xf32>
    %cst_31 = arith.constant 9.99999993E-9 : f32
    %34 = vector.broadcast %cst_31 : f32 to vector<8x32xf32>
    %35 = arith.addf %33, %34 : vector<8x32xf32>
    %cst_32 = arith.constant 9.99999993E-9 : f32
    %36 = vector.broadcast %cst_32 : f32 to vector<8x32xf32>
    %37 = arith.addf %35, %36 : vector<8x32xf32>
    %cst_33 = arith.constant 1.000000e+00 : f32
    %38 = vector.broadcast %cst_33 : f32 to vector<8x32xf32>
    %39 = arith.divf %38, %37 : vector<8x32xf32>
    %cst_34 = arith.constant 1.000000e+00 : f32
    %40 = vector.broadcast %cst_34 : f32 to vector<8x32xf32>
    %41 = arith.addf %40, %32 : vector<8x32xf32>
    %42 = arith.addf %41, %39 : vector<8x32xf32>
    %cst_35 = arith.constant 1.000000e+00 : f32
    %43 = vector.broadcast %cst_35 : f32 to vector<8x32xf32>
    %44 = arith.divf %43, %42 : vector<8x32xf32>
    %45 = arith.mulf %10, %32 : vector<8x32xf32>
    %46 = arith.mulf %20, %39 : vector<8x32xf32>
    %47 = arith.addf %45, %46 : vector<8x32xf32>
    %48 = arith.mulf %47, %44 : vector<8x32xf32>
    %cst_36 = arith.constant 9.99999993E-9 : f32
    %49 = vector.broadcast %cst_36 : f32 to vector<8x32xf32>
    %50 = arith.addf %44, %49 : vector<8x32xf32>
    %51 = math.log %50 : vector<8x32xf32>
    %c0_37 = arith.constant 0 : index
    %c0_38 = arith.constant 0 : index
    %52 = vector.load %arg3[%c0_37, %c0_38] : memref<8x32xf32, #tpu.memory_space<vmem>>, vector<8x32xf32>
    %cst_39 = arith.constant 5.000000e-01 : f32
    %53 = vector.broadcast %cst_39 : f32 to vector<8x32xf32>
    %54 = arith.mulf %53, %51 : vector<8x32xf32>
    %55 = math.exp %54 : vector<8x32xf32>
    %56 = arith.mulf %52, %55 : vector<8x32xf32>
    %57 = arith.addf %56, %48 : vector<8x32xf32>
    %c0_40 = arith.constant 0 : index
    %c0_41 = arith.constant 0 : index
    %58 = vector.load %arg4[%c0_40, %c0_41] : memref<64x32xf32, #tpu.memory_space<vmem>>, vector<64x32xf32>
    %cst_42 = arith.constant dense<0.000000e+00> : vector<8x64xf32>
    %59 = tpu.matmul %57, %58, %cst_42 {dimension_numbers = #tpu.dot_dimension_numbers<[1], [1], [0], [0], [0, 0, 1, 0], [], []>} : vector<8x32xf32>, vector<64x32xf32>, vector<8x64xf32> -> vector<8x64xf32>
    %c0_43 = arith.constant 0 : index
    %c0_44 = arith.constant 0 : index
    %60 = vector.load %arg5[%c0_43, %c0_44] : memref<64x32xf32, #tpu.memory_space<vmem>>, vector<64x32xf32>
    %cst_45 = arith.constant dense<0.000000e+00> : vector<8x64xf32>
    %61 = tpu.matmul %57, %60, %cst_45 {dimension_numbers = #tpu.dot_dimension_numbers<[1], [1], [0], [0], [0, 0, 1, 0], [], []>} : vector<8x32xf32>, vector<64x32xf32>, vector<8x64xf32> -> vector<8x64xf32>
    %c0_46 = arith.constant 0 : index
    %c0_47 = arith.constant 0 : index
    %62 = vector.load %arg14[%c0_46, %c0_47] : memref<8x64xf32, #tpu.memory_space<vmem>>, vector<8x64xf32>
    tpu.vector_store %arg14[%c0_46, %c0_47], %59 {strides = array<i32>} : memref<8x64xf32, #tpu.memory_space<vmem>>, vector<8x64xf32>,
    %c0_48 = arith.constant 0 : index
    %c0_49 = arith.constant 0 : index
    %63 = vector.load %arg15[%c0_48, %c0_49] : memref<8x64xf32, #tpu.memory_space<vmem>>, vector<8x64xf32>
    tpu.vector_store %arg15[%c0_48, %c0_49], %61 {strides = array<i32>} : memref<8x64xf32, #tpu.memory_space<vmem>>, vector<8x64xf32>,
    %c0_50 = arith.constant 0 : index
    %c0_51 = arith.constant 0 : index
    %64 = vector.load %arg16[%c0_50, %c0_51] : memref<8x32xf32, #tpu.memory_space<vmem>>, vector<8x32xf32>
    tpu.vector_store %arg16[%c0_50, %c0_51], %48 {strides = array<i32>} : memref<8x32xf32, #tpu.memory_space<vmem>>, vector<8x32xf32>,
    %c0_52 = arith.constant 0 : index
    %c0_53 = arith.constant 0 : index
    %65 = vector.load %arg17[%c0_52, %c0_53] : memref<8x32xf32, #tpu.memory_space<vmem>>, vector<8x32xf32>
    tpu.vector_store %arg17[%c0_52, %c0_53], %51 {strides = array<i32>} : memref<8x32xf32, #tpu.memory_space<vmem>>, vector<8x32xf32>,
    return
  }
  func.func @transform_0(%arg0: i32) -> (i32, i32) {
    %c0_i32 = arith.constant 0 : i32
    %c0_i32_0 = arith.constant 0 : i32
    return %arg0, %c0_i32 : i32, i32
  }
  func.func @transform_1(%arg0: i32) -> (i32, i32) {
    %c0_i32 = arith.constant 0 : i32
    %c0_i32_0 = arith.constant 0 : i32
    return %arg0, %c0_i32 : i32, i32
  }
  func.func @transform_2(%arg0: i32) -> (i32, i32) {
    %c0_i32 = arith.constant 0 : i32
    %c0_i32_0 = arith.constant 0 : i32
    return %arg0, %c0_i32 : i32, i32
  }
  func.func @transform_3(%arg0: i32) -> (i32, i32) {
    %c0_i32 = arith.constant 0 : i32
    %c0_i32_0 = arith.constant 0 : i32
    %c0_i32_1 = arith.constant 0 : i32
    return %c0_i32, %c0_i32_0 : i32, i32
  }
  func.func @transform_4(%arg0: i32) -> (i32, i32) {
    %c0_i32 = arith.constant 0 : i32
    %c0_i32_0 = arith.constant 0 : i32
    %c0_i32_1 = arith.constant 0 : i32
    return %c0_i32, %c0_i32_0 : i32, i32
  }
  func.func @transform_5(%arg0: i32) -> (i32, i32) {
    %c0_i32 = arith.constant 0 : i32
    %c0_i32_0 = arith.constant 0 : i32
    %c0_i32_1 = arith.constant 0 : i32
    return %c0_i32, %c0_i32_0 : i32, i32
  }
  func.func @transform_6(%arg0: i32) -> (i32, i32) {
    %c0_i32 = arith.constant 0 : i32
    %c0_i32_0 = arith.constant 0 : i32
    %c0_i32_1 = arith.constant 0 : i32
    return %c0_i32, %c0_i32_0 : i32, i32
  }
  func.func @transform_7(%arg0: i32) -> (i32, i32) {
    %c0_i32 = arith.constant 0 : i32
    %c0_i32_0 = arith.constant 0 : i32
    %c0_i32_1 = arith.constant 0 : i32
    return %c0_i32, %c0_i32_0 : i32, i32
  }
  func.func @transform_8(%arg0: i32) -> (i32, i32) {
    %c0_i32 = arith.constant 0 : i32
    %c0_i32_0 = arith.constant 0 : i32
    %c0_i32_1 = arith.constant 0 : i32
    return %c0_i32, %c0_i32_0 : i32, i32
  }
  func.func @transform_9(%arg0: i32) -> (i32, i32) {
    %c0_i32 = arith.constant 0 : i32
    %c0_i32_0 = arith.constant 0 : i32
    %c0_i32_1 = arith.constant 0 : i32
    return %c0_i32, %c0_i32_0 : i32, i32
  }
  func.func @transform_10(%arg0: i32) -> (i32, i32) {
    %c0_i32 = arith.constant 0 : i32
    %c0_i32_0 = arith.constant 0 : i32
    %c0_i32_1 = arith.constant 0 : i32
    return %c0_i32, %c0_i32_0 : i32, i32
  }
  func.func @transform_11(%arg0: i32) -> (i32, i32) {
    %c0_i32 = arith.constant 0 : i32
    %c0_i32_0 = arith.constant 0 : i32
    %c0_i32_1 = arith.constant 0 : i32
    return %c0_i32, %c0_i32_0 : i32, i32
  }
  func.func @transform_12(%arg0: i32) -> (i32, i32) {
    %c0_i32 = arith.constant 0 : i32
    %c0_i32_0 = arith.constant 0 : i32
    %c0_i32_1 = arith.constant 0 : i32
    return %c0_i32, %c0_i32_0 : i32, i32
  }
  func.func @transform_13(%arg0: i32) -> (i32, i32) {
    %c0_i32 = arith.constant 0 : i32
    %c0_i32_0 = arith.constant 0 : i32
    return %arg0, %c0_i32 : i32, i32
  }
  func.func @transform_14(%arg0: i32) -> (i32, i32) {
    %c0_i32 = arith.constant 0 : i32
    %c0_i32_0 = arith.constant 0 : i32
    return %arg0, %c0_i32 : i32, i32
  }
  func.func @transform_15(%arg0: i32) -> (i32, i32) {
    %c0_i32 = arith.constant 0 : i32
    %c0_i32_0 = arith.constant 0 : i32
    return %arg0, %c0_i32 : i32, i32
  }
  func.func @transform_16(%arg0: i32) -> (i32, i32) {
    %c0_i32 = arith.constant 0 : i32
    %c0_i32_0 = arith.constant 0 : i32
    return %arg0, %c0_i32 : i32, i32
  }
}

</mosaic_0001>

<llo_original>
// kernel: tpu_custom_call.1
$region0: #{tpu_custom_call.1}
  #allocation0 [shape = 'u32[]', space=smem, size = 0x4, offset = 0x4, fixed_abs, tag = 'smem constant byte address 0x4 - core index']
  #allocation1 [shape = 'u32[144,128]{1,0:T(1,128)}', space=vmem, size = 0x12000, scoped, tag = 'internal scratch']
  %s0 = inlined_call_operand.vmem [shape: f32[8,64], index: 0, kind: input, shape index: {}]
  %s1 = inlined_call_operand.vmem [shape: f32[8,64], index: 1, kind: input, shape index: {}]
  %s2 = inlined_call_operand.vmem [shape: f32[8,32], index: 2, kind: input, shape index: {}]
  %s3 = inlined_call_operand.vmem [shape: f32[64,32], index: 3, kind: input, shape index: {}]
  %s4 = inlined_call_operand.vmem [shape: f32[64,32], index: 4, kind: input, shape index: {}]
  %s5 = inlined_call_operand.vmem [shape: f32[32,32], index: 5, kind: input, shape index: {}]
  %s6 = inlined_call_operand.vmem [shape: f32[1,32], index: 6, kind: input, shape index: {}]
  %s7 = inlined_call_operand.vmem [shape: f32[32,32], index: 7, kind: input, shape index: {}]
  %s8 = inlined_call_operand.vmem [shape: f32[1,32], index: 8, kind: input, shape index: {}]
  %s9 = inlined_call_operand.vmem [shape: f32[32,32], index: 9, kind: input, shape index: {}]
  %s10 = inlined_call_operand.vmem [shape: f32[1,32], index: 10, kind: input, shape index: {}]
  %s11 = inlined_call_operand.vmem [shape: f32[32,32], index: 11, kind: input, shape index: {}]
  %s12 = inlined_call_operand.vmem [shape: f32[1,32], index: 12, kind: input, shape index: {}]
  %s13 = inlined_call_operand.hbm [shape: f32[8,64], index: 13, kind: output, shape index: {0}]
  %s14 = inlined_call_operand.hbm [shape: f32[8,64], index: 14, kind: output, shape index: {1}]
  %s15 = inlined_call_operand.hbm [shape: f32[8,32], index: 15, kind: output, shape index: {2}]
  %s16 = inlined_call_operand.hbm [shape: f32[8,32], index: 16, kind: output, shape index: {3}]
  %17 = xla_tuple %s13, %s14, %s15, %s16
  %s18 = sld [smem:[#allocation0]]
  $region86: #{tpu_custom_call.1} parent=0
    _
  %s20 = ssub.s32 1, %s18
  %s21 = scalar_select 0, %s20, %s18
  $region1: #{tpu_custom_call.1} parent=0
    #allocation2 [shape = 'u8[4096]{0}', space=vmem, size = 0x1000, scoped, tag = 'output window, operand 0, single buffered']
    #allocation3 [shape = 's32[1]{0}', space=sflag, size = 0x4, scoped, tag = 'scoped memory for tpu_custom_call.1']
    #allocation4 [shape = 'u8[4096]{0}', space=vmem, size = 0x1000, scoped, tag = 'output window, operand 1, single buffered']
    #allocation5 [shape = 's32[1]{0}', space=sflag, size = 0x4, scoped, tag = 'scoped memory for tpu_custom_call.1']
    #allocation6 [shape = 'u8[4096]{0}', space=vmem, size = 0x1000, scoped, tag = 'output window, operand 2, single buffered']
    #allocation7 [shape = 'u8[4096]{0}', space=vmem, size = 0x1000, scoped, tag = 'output window, operand 3, single buffered']
    #allocation8 [shape = 's32[1]{0}', space=sflag, size = 0x4, scoped, tag = 'scoped memory for tpu_custom_call.1']
    %22 = vsyncpa [#allocation3], 0
    %23 = vsyncpa [#allocation5], 0
    %24 = vsyncpa [#allocation8], 0
    // Predicated region
    $region2: #{tpu_custom_call.1} parent=1 // pred_check
      _
    $region3: #{tpu_custom_call.1} parent=1 // pred_check_branch
      %26 = sbr.rel (0) target = $region5
    $region4: #{tpu_custom_call.1} parent=1 // pred_region
      _
    $region5: #{tpu_custom_call.1} parent=1 // pred_fallthru
      _
    // Predicated region
    $region6: #{tpu_custom_call.1} parent=1 // pred_check
      _
    $region7: #{tpu_custom_call.1} parent=1 // pred_check_branch
      %28 = sbr.rel (0) target = $region9
    $region8: #{tpu_custom_call.1} parent=1 // pred_region
      _
    $region9: #{tpu_custom_call.1} parent=1 // pred_fallthru
      _
    // Predicated region
    $region10: #{tpu_custom_call.1} parent=1 // pred_check
      _
    $region11: #{tpu_custom_call.1} parent=1 // pred_check_branch
      %30 = sbr.rel (0) target = $region13
    $region12: #{tpu_custom_call.1} parent=1 // pred_region
      _
    $region13: #{tpu_custom_call.1} parent=1 // pred_fallthru
      _
    // Predicated region
    $region14: #{tpu_custom_call.1} parent=1 // pred_check
      _
    $region15: #{tpu_custom_call.1} parent=1 // pred_check_branch
      %32 = sbr.rel (0) target = $region17
    $region16: #{tpu_custom_call.1} parent=1 // pred_region
      _
    $region17: #{tpu_custom_call.1} parent=1 // pred_fallthru
      _
    // Predicated region
    $region18: #{tpu_custom_call.1} parent=1 // pred_check
      _
    $region19: #{tpu_custom_call.1} parent=1 // pred_check_branch
      %34 = sbr.rel (0) target = $region21
    $region20: #{tpu_custom_call.1} parent=1 // pred_region
      _
    $region21: #{tpu_custom_call.1} parent=1 // pred_fallthru
      _
    // Predicated region
    $region22: #{tpu_custom_call.1} parent=1 // pred_check
      _
    $region23: #{tpu_custom_call.1} parent=1 // pred_check_branch
      %36 = sbr.rel (0) target = $region25
    $region24: #{tpu_custom_call.1} parent=1 // pred_region
      _
    $region25: #{tpu_custom_call.1} parent=1 // pred_fallthru
      _
    // Predicated region
    $region26: #{tpu_custom_call.1} parent=1 // pred_check
      _
    $region27: #{tpu_custom_call.1} parent=1 // pred_check_branch
      %38 = sbr.rel (0) target = $region29
    $region28: #{tpu_custom_call.1} parent=1 // pred_region
      _
    $region29: #{tpu_custom_call.1} parent=1 // pred_fallthru
      _
    // Predicated region
    $region30: #{tpu_custom_call.1} parent=1 // pred_check
      _
    $region31: #{tpu_custom_call.1} parent=1 // pred_check_branch
      %40 = sbr.rel (0) target = $region33
    $region32: #{tpu_custom_call.1} parent=1 // pred_region
      _
    $region33: #{tpu_custom_call.1} parent=1 // pred_fallthru
      _
    // Predicated region
    $region34: #{tpu_custom_call.1} parent=1 // pred_check
      _
    $region35: #{tpu_custom_call.1} parent=1 // pred_check_branch
      %42 = sbr.rel (0) target = $region37
    $region36: #{tpu_custom_call.1} parent=1 // pred_region
      _
    $region37: #{tpu_custom_call.1} parent=1 // pred_fallthru
      _
    // Predicated region
    $region38: #{tpu_custom_call.1} parent=1 // pred_check
      _
    $region39: #{tpu_custom_call.1} parent=1 // pred_check_branch
      %44 = sbr.rel (0) target = $region41
    $region40: #{tpu_custom_call.1} parent=1 // pred_region
      _
    $region41: #{tpu_custom_call.1} parent=1 // pred_fallthru
      _
    // Predicated region
    $region42: #{tpu_custom_call.1} parent=1 // pred_check
      _
    $region43: #{tpu_custom_call.1} parent=1 // pred_check_branch
      %46 = sbr.rel (0) target = $region45
    $region44: #{tpu_custom_call.1} parent=1 // pred_region
      _
    $region45: #{tpu_custom_call.1} parent=1 // pred_fallthru
      _
    // Predicated region
    $region46: #{tpu_custom_call.1} parent=1 // pred_check
      _
    $region47: #{tpu_custom_call.1} parent=1 // pred_check_branch
      %48 = sbr.rel (0) target = $region49
    $region48: #{tpu_custom_call.1} parent=1 // pred_region
      _
    $region49: #{tpu_custom_call.1} parent=1 // pred_fallthru
      _
    // Predicated region
    $region50: #{tpu_custom_call.1} parent=1 // pred_check
      _
    $region51: #{tpu_custom_call.1} parent=1 // pred_check_branch
      %50 = sbr.rel (0) target = $region53
    $region52: #{tpu_custom_call.1} parent=1 // pred_region
      _
    $region53: #{tpu_custom_call.1} parent=1 // pred_fallthru
      _
    %v51 = vld [vmem:[%s0] sm:$0xff]
    %v52 = vld [vmem:[%s3] sm:$0xff]
    %v53 = vld [vmem:[%s3 + $0x8] sm:$0xff]
    %v54 = vld [vmem:[%s3 + $0x10] sm:$0xff]
    %v55 = vld [vmem:[%s3 + $0x18] sm:$0xff]
    %v56 = vld [vmem:[%s3 + $0x20] sm:$0xff]
    %v57 = vld [vmem:[%s3 + $0x28] sm:$0xff]
    %v58 = vld [vmem:[%s3 + $0x30] sm:$0xff]
    %v59 = vld [vmem:[%s3 + $0x38] sm:$0xff]
    %vm60 = vcmask 523264
    %v62 = vsel %vm60, %v51, 0
    %64 = vmatprep.subr.mxu0 0.0
    %65 = vmatpush1.msra.mxu0 %v52
    %66 = vmatprep.subr.mxu0 0.0
    %67 = vmatpush1.msra.mxu0 %v53
    %68 = vmatprep.subr.mxu0 0.0
    %69 = vmatpush1.msra.mxu0 %v54
    %70 = vmatprep.subr.mxu0 0.0
    %71 = vmatpush1.msra.mxu0 %v55
    %72 = vmatprep.subr.mxu0 0.0
    %73 = vmatpush1.msra.mxu0 %v56
    %74 = vmatprep.subr.mxu0 0.0
    %75 = vmatpush1.msra.mxu0 %v57
    %76 = vmatprep.subr.mxu0 0.0
    %77 = vmatpush1.msra.mxu0 %v58
    %78 = vmatprep.subr.mxu0 0.0
    %79 = vmatpush1.msra.mxu0 %v59
    %80 = vmatprep.subr.mxu0 0.0
    %81 = vmatpush1.msra.mxu0 0.0
    %82 = vmatprep.subr.mxu0 0.0
    %83 = vmatpush1.msra.mxu0 0.0
    %84 = vmatprep.subr.mxu0 0.0
    %85 = vmatpush1.msra.mxu0 0.0
    %86 = vmatprep.subr.mxu0 0.0
    %87 = vmatpush1.msra.mxu0 0.0
    %88 = vmatprep.subr.mxu0 0.0
    %89 = vmatpush1.msra.mxu0 0.0
    %90 = vmatprep.subr.mxu0 0.0
    %91 = vmatpush1.msra.mxu0 0.0
    %92 = vmatprep.subr.mxu0 0.0
    %93 = vmatpush1.msra.mxu0 0.0
    %94 = vmatprep.subr.mxu0 0.0
    %95 = vmatpush1.msra.mxu0 0.0
    %96 = vmatprep.subr.mxu0 0.0
    %97 = vmatpush1.msra.mxu0 0.0
    %98 = vmatprep.subr.mxu0 0.0
    %99 = vmatpush1.msra.mxu0 0.0
    %100 = vmatprep.subr.mxu0 0.0
    %101 = vmatpush1.msra.mxu0 0.0
    %102 = vmatprep.subr.mxu0 0.0
    %103 = vmatpush1.msra.mxu0 0.0
    %104 = vmatprep.subr.mxu0 0.0
    %105 = vmatpush1.msra.mxu0 0.0
    %106 = vmatprep.subr.mxu0 0.0
    %107 = vmatpush1.msra.mxu0 0.0
    %108 = vmatprep.subr.mxu0 0.0
    %109 = vmatpush1.msra.mxu0 0.0
    %110 = vmatprep.subr.mxu0 0.0
    %111 = vmatpush1.msra.mxu0 0.0
    %112 = vmatprep.subr.mxu0 0.0
    %113 = vmatpush1.msra.mxu0 0.0
    %114 = vmatprep.subr.mxu0 0.0
    %115 = vmatpush1.msra.mxu0 0.0
    %116 = vmatprep.subr.mxu0 0.0
    %117 = vmatpush1.msra.mxu0 0.0
    %118 = vmatprep.subr.mxu0 0.0
    %119 = vmatpush1.msra.mxu0 0.0
    %120 = vmatprep.subr.mxu0 0.0
    %121 = vmatpush1.msra.mxu0 0.0
    %122 = vmatprep.subr.mxu0 0.0
    %123 = vmatpush1.msra.mxu0 0.0
    %124 = vmatprep.subr.mxu0 0.0
    %125 = vmatpush1.msra.mxu0 0.0
    %126 = vmatprep.subr.mxu0 0.0
    %127 = vmatpush1.msra.mxu0 0.0
    %128 = vmatprep.mubr.f32.mxu0 0.0
    %129 = vmatmul.mubr.f32.gmra.mrb[0].mxu0 %v62
    %v130 = vpop.f32.mrb[0].mxu0
    %v131 = vadd.f32 0.0, %v130
    %v132 = vpop.f32.mrb[0].mxu0
    %133 = vdwg.mxu0
    %v134 = vld [vmem:[%s1] sm:$0xff]
    %v135 = vld [vmem:[%s4] sm:$0xff]
    %v136 = vld [vmem:[%s4 + $0x8] sm:$0xff]
    %v137 = vld [vmem:[%s4 + $0x10] sm:$0xff]
    %v138 = vld [vmem:[%s4 + $0x18] sm:$0xff]
    %v139 = vld [vmem:[%s4 + $0x20] sm:$0xff]
    %v140 = vld [vmem:[%s4 + $0x28] sm:$0xff]
    %v141 = vld [vmem:[%s4 + $0x30] sm:$0xff]
    %v142 = vld [vmem:[%s4 + $0x38] sm:$0xff]
    %v144 = vsel %vm60, %v134, 0
    %146 = vmatprep.subr.mxu0 0.0
    %147 = vmatpush1.msra.mxu0 %v135
    %148 = vmatprep.subr.mxu0 0.0
    %149 = vmatpush1.msra.mxu0 %v136
    %150 = vmatprep.subr.mxu0 0.0
    %151 = vmatpush1.msra.mxu0 %v137
    %152 = vmatprep.subr.mxu0 0.0
    %153 = vmatpush1.msra.mxu0 %v138
    %154 = vmatprep.subr.mxu0 0.0
    %155 = vmatpush1.msra.mxu0 %v139
    %156 = vmatprep.subr.mxu0 0.0
    %157 = vmatpush1.msra.mxu0 %v140
    %158 = vmatprep.subr.mxu0 0.0
    %159 = vmatpush1.msra.mxu0 %v141
    %160 = vmatprep.subr.mxu0 0.0
    %161 = vmatpush1.msra.mxu0 %v142
    %162 = vmatprep.subr.mxu0 0.0
    %163 = vmatpush1.msra.mxu0 0.0
    %164 = vmatprep.subr.mxu0 0.0
    %165 = vmatpush1.msra.mxu0 0.0
    %166 = vmatprep.subr.mxu0 0.0
    %167 = vmatpush1.msra.mxu0 0.0
    %168 = vmatprep.subr.mxu0 0.0
    %169 = vmatpush1.msra.mxu0 0.0
    %170 = vmatprep.subr.mxu0 0.0
    %171 = vmatpush1.msra.mxu0 0.0
    %172 = vmatprep.subr.mxu0 0.0
    %173 = vmatpush1.msra.mxu0 0.0
    %174 = vmatprep.subr.mxu0 0.0
    %175 = vmatpush1.msra.mxu0 0.0
    %176 = vmatprep.subr.mxu0 0.0
    %177 = vmatpush1.msra.mxu0 0.0
    %178 = vmatprep.subr.mxu0 0.0
    %179 = vmatpush1.msra.mxu0 0.0
    %180 = vmatprep.subr.mxu0 0.0
    %181 = vmatpush1.msra.mxu0 0.0
    %182 = vmatprep.subr.mxu0 0.0
    %183 = vmatpush1.msra.mxu0 0.0
    %184 = vmatprep.subr.mxu0 0.0
    %185 = vmatpush1.msra.mxu0 0.0
    %186 = vmatprep.subr.mxu0 0.0
    %187 = vmatpush1.msra.mxu0 0.0
    %188 = vmatprep.subr.mxu0 0.0
    %189 = vmatpush1.msra.mxu0 0.0
    %190 = vmatprep.subr.mxu0 0.0
    %191 = vmatpush1.msra.mxu0 0.0
    %192 = vmatprep.subr.mxu0 0.0
    %193 = vmatpush1.msra.mxu0 0.0
    %194 = vmatprep.subr.mxu0 0.0
    %195 = vmatpush1.msra.mxu0 0.0
    %196 = vmatprep.subr.mxu0 0.0
    %197 = vmatpush1.msra.mxu0 0.0
    %198 = vmatprep.subr.mxu0 0.0
    %199 = vmatpush1.msra.mxu0 0.0
    %200 = vmatprep.subr.mxu0 0.0
    %201 = vmatpush1.msra.mxu0 0.0
    %202 = vmatprep.subr.mxu0 0.0
    %203 = vmatpush1.msra.mxu0 0.0
    %204 = vmatprep.subr.mxu0 0.0
    %205 = vmatpush1.msra.mxu0 0.0
    %206 = vmatprep.subr.mxu0 0.0
    %207 = vmatpush1.msra.mxu0 0.0
    %208 = vmatprep.subr.mxu0 0.0
    %209 = vmatpush1.msra.mxu0 0.0
    %210 = vmatprep.mubr.f32.mxu0 0.0
    %211 = vmatmul.mubr.f32.gmra.mrb[0].mxu0 %v144
    %v212 = vpop.f32.mrb[0].mxu0
    %v213 = vadd.f32 0.0, %v212
    %v214 = vpop.f32.mrb[0].mxu0
    %215 = vdwg.mxu0
    %v216 = vld [vmem:[%s5] sm:$0xff]
    %v217 = vld [vmem:[%s5 + $0x8] sm:$0xff]
    %v218 = vld [vmem:[%s5 + $0x10] sm:$0xff]
    %v219 = vld [vmem:[%s5 + $0x18] sm:$0xff]
    %v220 = vld [vmem:[%s6] sm:$0x1]
    %v222 = vlaneseq
    %v223 = vshrl.u32 %v222, 7
    %v224 = vsub.s32 0, %v223
    %v225 = vrot.slane %v220, %v224
    %vm227 = vcmask 261120
    %v229 = vsel %vm227, %v131, 0
    %v232 = vsel %vm227, %v216, 0
    %v235 = vsel %vm227, %v217, 0
    %v238 = vsel %vm227, %v218, 0
    %v241 = vsel %vm227, %v219, 0
    %243 = vmatprep.subr.mxu0 0.0
    %244 = vmatpush1.xpose.msra.mxu0 %v232
    %245 = vmatprep.subr.mxu0 0.0
    %246 = vmatpush1.xpose.msra.mxu0 %v235
    %247 = vmatprep.subr.mxu0 0.0
    %248 = vmatpush1.xpose.msra.mxu0 %v238
    %249 = vmatprep.subr.mxu0 0.0
    %250 = vmatpush1.xpose.msra.mxu0 %v241
    %251 = vmatprep.subr.mxu0 0.0
    %252 = vmatpush1.xpose.msra.mxu0 0.0
    %253 = vmatprep.subr.mxu0 0.0
    %254 = vmatpush1.xpose.msra.mxu0 0.0
    %255 = vmatprep.subr.mxu0 0.0
    %256 = vmatpush1.xpose.msra.mxu0 0.0
    %257 = vmatprep.subr.mxu0 0.0
    %258 = vmatpush1.xpose.msra.mxu0 0.0
    %259 = vmatprep.subr.mxu0 0.0
    %260 = vmatpush1.xpose.msra.mxu0 0.0
    %261 = vmatprep.subr.mxu0 0.0
    %262 = vmatpush1.xpose.msra.mxu0 0.0
    %263 = vmatprep.subr.mxu0 0.0
    %264 = vmatpush1.xpose.msra.mxu0 0.0
    %265 = vmatprep.subr.mxu0 0.0
    %266 = vmatpush1.xpose.msra.mxu0 0.0
    %267 = vmatprep.subr.mxu0 0.0
    %268 = vmatpush1.xpose.msra.mxu0 0.0
    %269 = vmatprep.subr.mxu0 0.0
    %270 = vmatpush1.xpose.msra.mxu0 0.0
    %271 = vmatprep.subr.mxu0 0.0
    %272 = vmatpush1.xpose.msra.mxu0 0.0
    %273 = vmatprep.subr.mxu0 0.0
    %274 = vmatpush1.xpose.msra.mxu0 0.0
    %275 = vmatprep.subr.mxu0 0.0
    %276 = vmatpush1.xpose.msra.mxu0 0.0
    %277 = vmatprep.subr.mxu0 0.0
    %278 = vmatpush1.xpose.msra.mxu0 0.0
    %279 = vmatprep.subr.mxu0 0.0
    %280 = vmatpush1.xpose.msra.mxu0 0.0
    %281 = vmatprep.subr.mxu0 0.0
    %282 = vmatpush1.xpose.msra.mxu0 0.0
    %283 = vmatprep.subr.mxu0 0.0
    %284 = vmatpush1.xpose.msra.mxu0 0.0
    %285 = vmatprep.subr.mxu0 0.0
    %286 = vmatpush1.xpose.msra.mxu0 0.0
    %287 = vmatprep.subr.mxu0 0.0
    %288 = vmatpush1.xpose.msra.mxu0 0.0
    %289 = vmatprep.subr.mxu0 0.0
    %290 = vmatpush1.xpose.msra.mxu0 0.0
    %291 = vmatprep.subr.mxu0 0.0
    %292 = vmatpush1.xpose.msra.mxu0 0.0
    %293 = vmatprep.subr.mxu0 0.0
    %294 = vmatpush1.xpose.msra.mxu0 0.0
    %295 = vmatprep.subr.mxu0 0.0
    %296 = vmatpush1.xpose.msra.mxu0 0.0
    %297 = vmatprep.subr.mxu0 0.0
    %298 = vmatpush1.xpose.msra.mxu0 0.0
    %299 = vmatprep.subr.mxu0 0.0
    %300 = vmatpush1.xpose.msra.mxu0 0.0
    %301 = vmatprep.subr.mxu0 0.0
    %302 = vmatpush1.xpose.msra.mxu0 0.0
    %303 = vmatprep.subr.mxu0 0.0
    %304 = vmatpush1.xpose.msra.mxu0 0.0
    %305 = vmatprep.subr.mxu0 0.0
    %306 = vmatpush1.xpose.msra.mxu0 0.0
    %307 = vmatprep.mubr.f32.mxu0 0.0
    %308 = vmatmul.mubr.f32.gmra.mrb[0].mxu0 %v229
    %v309 = vpop.f32.mrb[0].mxu0
    %v310 = vadd.f32 %v225, %v309
    %v311 = vpop.f32.mrb[0].mxu0
    %312 = vdwg.mxu0
    %v313 = vld [vmem:[%s7] sm:$0xff]
    %v314 = vld [vmem:[%s7 + $0x8] sm:$0xff]
    %v315 = vld [vmem:[%s7 + $0x10] sm:$0xff]
    %v316 = vld [vmem:[%s7 + $0x18] sm:$0xff]
    %v317 = vld [vmem:[%s8] sm:$0x1]
    %v319 = vlaneseq
    %v320 = vshrl.u32 %v319, 7
    %v321 = vsub.s32 0, %v320
    %v322 = vrot.slane %v317, %v321
    %v325 = vsel %vm227, %v313, 0
    %v328 = vsel %vm227, %v314, 0
    %v331 = vsel %vm227, %v315, 0
    %v334 = vsel %vm227, %v316, 0
    %336 = vmatprep.subr.mxu0 0.0
    %337 = vmatpush1.xpose.msra.mxu0 %v325
    %338 = vmatprep.subr.mxu0 0.0
    %339 = vmatpush1.xpose.msra.mxu0 %v328
    %340 = vmatprep.subr.mxu0 0.0
    %341 = vmatpush1.xpose.msra.mxu0 %v331
    %342 = vmatprep.subr.mxu0 0.0
    %343 = vmatpush1.xpose.msra.mxu0 %v334
    %344 = vmatprep.subr.mxu0 0.0
    %345 = vmatpush1.xpose.msra.mxu0 0.0
    %346 = vmatprep.subr.mxu0 0.0
    %347 = vmatpush1.xpose.msra.mxu0 0.0
    %348 = vmatprep.subr.mxu0 0.0
    %349 = vmatpush1.xpose.msra.mxu0 0.0
    %350 = vmatprep.subr.mxu0 0.0
    %351 = vmatpush1.xpose.msra.mxu0 0.0
    %352 = vmatprep.subr.mxu0 0.0
    %353 = vmatpush1.xpose.msra.mxu0 0.0
    %354 = vmatprep.subr.mxu0 0.0
    %355 = vmatpush1.xpose.msra.mxu0 0.0
    %356 = vmatprep.subr.mxu0 0.0
    %357 = vmatpush1.xpose.msra.mxu0 0.0
    %358 = vmatprep.subr.mxu0 0.0
    %359 = vmatpush1.xpose.msra.mxu0 0.0
    %360 = vmatprep.subr.mxu0 0.0
    %361 = vmatpush1.xpose.msra.mxu0 0.0
    %362 = vmatprep.subr.mxu0 0.0
    %363 = vmatpush1.xpose.msra.mxu0 0.0
    %364 = vmatprep.subr.mxu0 0.0
    %365 = vmatpush1.xpose.msra.mxu0 0.0
    %366 = vmatprep.subr.mxu0 0.0
    %367 = vmatpush1.xpose.msra.mxu0 0.0
    %368 = vmatprep.subr.mxu0 0.0
    %369 = vmatpush1.xpose.msra.mxu0 0.0
    %370 = vmatprep.subr.mxu0 0.0
    %371 = vmatpush1.xpose.msra.mxu0 0.0
    %372 = vmatprep.subr.mxu0 0.0
    %373 = vmatpush1.xpose.msra.mxu0 0.0
    %374 = vmatprep.subr.mxu0 0.0
    %375 = vmatpush1.xpose.msra.mxu0 0.0
    %376 = vmatprep.subr.mxu0 0.0
    %377 = vmatpush1.xpose.msra.mxu0 0.0
    %378 = vmatprep.subr.mxu0 0.0
    %379 = vmatpush1.xpose.msra.mxu0 0.0
    %380 = vmatprep.subr.mxu0 0.0
    %381 = vmatpush1.xpose.msra.mxu0 0.0
    %382 = vmatprep.subr.mxu0 0.0
    %383 = vmatpush1.xpose.msra.mxu0 0.0
    %384 = vmatprep.subr.mxu0 0.0
    %385 = vmatpush1.xpose.msra.mxu0 0.0
    %386 = vmatprep.subr.mxu0 0.0
    %387 = vmatpush1.xpose.msra.mxu0 0.0
    %388 = vmatprep.subr.mxu0 0.0
    %389 = vmatpush1.xpose.msra.mxu0 0.0
    %390 = vmatprep.subr.mxu0 0.0
    %391 = vmatpush1.xpose.msra.mxu0 0.0
    %392 = vmatprep.subr.mxu0 0.0
    %393 = vmatpush1.xpose.msra.mxu0 0.0
    %394 = vmatprep.subr.mxu0 0.0
    %395 = vmatpush1.xpose.msra.mxu0 0.0
    %396 = vmatprep.subr.mxu0 0.0
    %397 = vmatpush1.xpose.msra.mxu0 0.0
    %398 = vmatprep.subr.mxu0 0.0
    %399 = vmatpush1.xpose.msra.mxu0 0.0
    %400 = vmatprep.mubr.f32.mxu0 0.0
    %401 = vmatmul.mubr.f32.gmra.mrb[0].mxu0 %v229
    %v402 = vpop.f32.mrb[0].mxu0
    %v403 = vadd.f32 %v322, %v402
    %v404 = vpop.f32.mrb[0].mxu0
    %405 = vdwg.mxu0
    %v406 = vld [vmem:[%s9] sm:$0xff]
    %v407 = vld [vmem:[%s9 + $0x8] sm:$0xff]
    %v408 = vld [vmem:[%s9 + $0x10] sm:$0xff]
    %v409 = vld [vmem:[%s9 + $0x18] sm:$0xff]
    %v410 = vld [vmem:[%s10] sm:$0x1]
    %v412 = vlaneseq
    %v413 = vshrl.u32 %v412, 7
    %v414 = vsub.s32 0, %v413
    %v415 = vrot.slane %v410, %v414
    %v418 = vsel %vm227, %v213, 0
    %v421 = vsel %vm227, %v406, 0
    %v424 = vsel %vm227, %v407, 0
    %v427 = vsel %vm227, %v408, 0
    %v430 = vsel %vm227, %v409, 0
    %432 = vmatprep.subr.mxu0 0.0
    %433 = vmatpush1.xpose.msra.mxu0 %v421
    %434 = vmatprep.subr.mxu0 0.0
    %435 = vmatpush1.xpose.msra.mxu0 %v424
    %436 = vmatprep.subr.mxu0 0.0
    %437 = vmatpush1.xpose.msra.mxu0 %v427
    %438 = vmatprep.subr.mxu0 0.0
    %439 = vmatpush1.xpose.msra.mxu0 %v430
    %440 = vmatprep.subr.mxu0 0.0
    %441 = vmatpush1.xpose.msra.mxu0 0.0
    %442 = vmatprep.subr.mxu0 0.0
    %443 = vmatpush1.xpose.msra.mxu0 0.0
    %444 = vmatprep.subr.mxu0 0.0
    %445 = vmatpush1.xpose.msra.mxu0 0.0
    %446 = vmatprep.subr.mxu0 0.0
    %447 = vmatpush1.xpose.msra.mxu0 0.0
    %448 = vmatprep.subr.mxu0 0.0
    %449 = vmatpush1.xpose.msra.mxu0 0.0
    %450 = vmatprep.subr.mxu0 0.0
    %451 = vmatpush1.xpose.msra.mxu0 0.0
    %452 = vmatprep.subr.mxu0 0.0
    %453 = vmatpush1.xpose.msra.mxu0 0.0
    %454 = vmatprep.subr.mxu0 0.0
    %455 = vmatpush1.xpose.msra.mxu0 0.0
    %456 = vmatprep.subr.mxu0 0.0
    %457 = vmatpush1.xpose.msra.mxu0 0.0
    %458 = vmatprep.subr.mxu0 0.0
    %459 = vmatpush1.xpose.msra.mxu0 0.0
    %460 = vmatprep.subr.mxu0 0.0
    %461 = vmatpush1.xpose.msra.mxu0 0.0
    %462 = vmatprep.subr.mxu0 0.0
    %463 = vmatpush1.xpose.msra.mxu0 0.0
    %464 = vmatprep.subr.mxu0 0.0
    %465 = vmatpush1.xpose.msra.mxu0 0.0
    %466 = vmatprep.subr.mxu0 0.0
    %467 = vmatpush1.xpose.msra.mxu0 0.0
    %468 = vmatprep.subr.mxu0 0.0
    %469 = vmatpush1.xpose.msra.mxu0 0.0
    %470 = vmatprep.subr.mxu0 0.0
    %471 = vmatpush1.xpose.msra.mxu0 0.0
    %472 = vmatprep.subr.mxu0 0.0
    %473 = vmatpush1.xpose.msra.mxu0 0.0
    %474 = vmatprep.subr.mxu0 0.0
    %475 = vmatpush1.xpose.msra.mxu0 0.0
    %476 = vmatprep.subr.mxu0 0.0
    %477 = vmatpush1.xpose.msra.mxu0 0.0
    %478 = vmatprep.subr.mxu0 0.0
    %479 = vmatpush1.xpose.msra.mxu0 0.0
    %480 = vmatprep.subr.mxu0 0.0
    %481 = vmatpush1.xpose.msra.mxu0 0.0
    %482 = vmatprep.subr.mxu0 0.0
    %483 = vmatpush1.xpose.msra.mxu0 0.0
    %484 = vmatprep.subr.mxu0 0.0
    %485 = vmatpush1.xpose.msra.mxu0 0.0
    %486 = vmatprep.subr.mxu0 0.0
    %487 = vmatpush1.xpose.msra.mxu0 0.0
    %488 = vmatprep.subr.mxu0 0.0
    %489 = vmatpush1.xpose.msra.mxu0 0.0
    %490 = vmatprep.subr.mxu0 0.0
    %491 = vmatpush1.xpose.msra.mxu0 0.0
    %492 = vmatprep.subr.mxu0 0.0
    %493 = vmatpush1.xpose.msra.mxu0 0.0
    %494 = vmatprep.subr.mxu0 0.0
    %495 = vmatpush1.xpose.msra.mxu0 0.0
    %496 = vmatprep.mubr.f32.mxu0 0.0
    %497 = vmatmul.mubr.f32.gmra.mrb[0].mxu0 %v418
    %v498 = vpop.f32.mrb[0].mxu0
    %v499 = vadd.f32 %v415, %v498
    %v500 = vpop.f32.mrb[0].mxu0
    %501 = vdwg.mxu0
    %v502 = vld [vmem:[%s11] sm:$0xff]
    %v503 = vld [vmem:[%s11 + $0x8] sm:$0xff]
    %v504 = vld [vmem:[%s11 + $0x10] sm:$0xff]
    %v505 = vld [vmem:[%s11 + $0x18] sm:$0xff]
    %v506 = vld [vmem:[%s12] sm:$0x1]
    %v508 = vlaneseq
    %v509 = vshrl.u32 %v508, 7
    %v510 = vsub.s32 0, %v509
    %v511 = vrot.slane %v506, %v510
    %v514 = vsel %vm227, %v502, 0
    %v517 = vsel %vm227, %v503, 0
    %v520 = vsel %vm227, %v504, 0
    %v523 = vsel %vm227, %v505, 0
    %525 = vmatprep.subr.mxu0 0.0
    %526 = vmatpush1.xpose.msra.mxu0 %v514
    %527 = vmatprep.subr.mxu0 0.0
    %528 = vmatpush1.xpose.msra.mxu0 %v517
    %529 = vmatprep.subr.mxu0 0.0
    %530 = vmatpush1.xpose.msra.mxu0 %v520
    %531 = vmatprep.subr.mxu0 0.0
    %532 = vmatpush1.xpose.msra.mxu0 %v523
    %533 = vmatprep.subr.mxu0 0.0
    %534 = vmatpush1.xpose.msra.mxu0 0.0
    %535 = vmatprep.subr.mxu0 0.0
    %536 = vmatpush1.xpose.msra.mxu0 0.0
    %537 = vmatprep.subr.mxu0 0.0
    %538 = vmatpush1.xpose.msra.mxu0 0.0
    %539 = vmatprep.subr.mxu0 0.0
    %540 = vmatpush1.xpose.msra.mxu0 0.0
    %541 = vmatprep.subr.mxu0 0.0
    %542 = vmatpush1.xpose.msra.mxu0 0.0
    %543 = vmatprep.subr.mxu0 0.0
    %544 = vmatpush1.xpose.msra.mxu0 0.0
    %545 = vmatprep.subr.mxu0 0.0
    %546 = vmatpush1.xpose.msra.mxu0 0.0
    %547 = vmatprep.subr.mxu0 0.0
    %548 = vmatpush1.xpose.msra.mxu0 0.0
    %549 = vmatprep.subr.mxu0 0.0
    %550 = vmatpush1.xpose.msra.mxu0 0.0
    %551 = vmatprep.subr.mxu0 0.0
    %552 = vmatpush1.xpose.msra.mxu0 0.0
    %553 = vmatprep.subr.mxu0 0.0
    %554 = vmatpush1.xpose.msra.mxu0 0.0
    %555 = vmatprep.subr.mxu0 0.0
    %556 = vmatpush1.xpose.msra.mxu0 0.0
    %557 = vmatprep.subr.mxu0 0.0
    %558 = vmatpush1.xpose.msra.mxu0 0.0
    %559 = vmatprep.subr.mxu0 0.0
    %560 = vmatpush1.xpose.msra.mxu0 0.0
    %561 = vmatprep.subr.mxu0 0.0
    %562 = vmatpush1.xpose.msra.mxu0 0.0
    %563 = vmatprep.subr.mxu0 0.0
    %564 = vmatpush1.xpose.msra.mxu0 0.0
    %565 = vmatprep.subr.mxu0 0.0
    %566 = vmatpush1.xpose.msra.mxu0 0.0
    %567 = vmatprep.subr.mxu0 0.0
    %568 = vmatpush1.xpose.msra.mxu0 0.0
    %569 = vmatprep.subr.mxu0 0.0
    %570 = vmatpush1.xpose.msra.mxu0 0.0
    %571 = vmatprep.subr.mxu0 0.0
    %572 = vmatpush1.xpose.msra.mxu0 0.0
    %573 = vmatprep.subr.mxu0 0.0
    %574 = vmatpush1.xpose.msra.mxu0 0.0
    %575 = vmatprep.subr.mxu0 0.0
    %576 = vmatpush1.xpose.msra.mxu0 0.0
    %577 = vmatprep.subr.mxu0 0.0
    %578 = vmatpush1.xpose.msra.mxu0 0.0
    %579 = vmatprep.subr.mxu0 0.0
    %580 = vmatpush1.xpose.msra.mxu0 0.0
    %581 = vmatprep.subr.mxu0 0.0
    %582 = vmatpush1.xpose.msra.mxu0 0.0
    %583 = vmatprep.subr.mxu0 0.0
    %584 = vmatpush1.xpose.msra.mxu0 0.0
    %585 = vmatprep.subr.mxu0 0.0
    %586 = vmatpush1.xpose.msra.mxu0 0.0
    %587 = vmatprep.subr.mxu0 0.0
    %588 = vmatpush1.xpose.msra.mxu0 0.0
    %589 = vmatprep.mubr.f32.mxu0 0.0
    %590 = vmatmul.mubr.f32.gmra.mrb[0].mxu0 %v418
    %v591 = vpop.f32.mrb[0].mxu0
    %v592 = vadd.f32 %v511, %v591
    %v593 = vpop.f32.mrb[0].mxu0
    %594 = vdwg.mxu0
    %v595 = vmul.f32 %v403, 1.442695
    %v596 = vpow.pop %v595
    %v597 = vadd.f32 %v596, 1e-08
    %v598 = vadd.f32 %v597, 1e-08
    %v599 = vrcp.pop %v598
    %v600 = vmul.f32 1.0, %v599
    %v601 = vmul.f32 %v592, 1.442695
    %v602 = vpow.pop %v601
    %v603 = vadd.f32 %v602, 1e-08
    %v604 = vadd.f32 %v603, 1e-08
    %v605 = vrcp.pop %v604
    %v606 = vmul.f32 1.0, %v605
    %v607 = vadd.f32 %v600, 1.0
    %v608 = vadd.f32 %v607, %v606
    %v609 = vrcp.pop %v608
    %v610 = vmul.f32 1.0, %v609
    %v611 = vmul.f32 %v310, %v600
    %v612 = vmul.f32 %v499, %v606
    %v613 = vadd.f32 %v611, %v612
    %v614 = vmul.f32 %v613, %v610
    %v615 = vadd.f32 %v610, 1e-08
    %v616 = vlog2.pop %v615
    %v617 = vmul.f32 %v616, 0.6931472
    %v618 = vld [vmem:[%s2] sm:$0xff]
    %v619 = vmul.f32 %v617, 0.5
    %v620 = vmul.f32 %v619, 1.442695
    %v621 = vpow.pop %v620
    %v622 = vmul.f32 %v618, %v621
    %v623 = vadd.f32 %v622, %v614
    %v625 = vsel %vm227, %v623, 0
    %v628 = vsel %vm227, %v52, 0
    %v631 = vsel %vm227, %v53, 0
    %v634 = vsel %vm227, %v54, 0
    %v637 = vsel %vm227, %v55, 0
    %v640 = vsel %vm227, %v56, 0
    %v643 = vsel %vm227, %v57, 0
    %v646 = vsel %vm227, %v58, 0
    %v649 = vsel %vm227, %v59, 0
    %651 = vmatprep.subr.mxu0 0.0
    %652 = vmatpush1.xpose.msra.mxu0 %v628
    %653 = vmatprep.subr.mxu0 0.0
    %654 = vmatpush1.xpose.msra.mxu0 %v631
    %655 = vmatprep.subr.mxu0 0.0
    %656 = vmatpush1.xpose.msra.mxu0 %v634
    %657 = vmatprep.subr.mxu0 0.0
    %658 = vmatpush1.xpose.msra.mxu0 %v637
    %659 = vmatprep.subr.mxu0 0.0
    %660 = vmatpush1.xpose.msra.mxu0 %v640
    %661 = vmatprep.subr.mxu0 0.0
    %662 = vmatpush1.xpose.msra.mxu0 %v643
    %663 = vmatprep.subr.mxu0 0.0
    %664 = vmatpush1.xpose.msra.mxu0 %v646
    %665 = vmatprep.subr.mxu0 0.0
    %666 = vmatpush1.xpose.msra.mxu0 %v649
    %667 = vmatprep.subr.mxu0 0.0
    %668 = vmatpush1.xpose.msra.mxu0 0.0
    %669 = vmatprep.subr.mxu0 0.0
    %670 = vmatpush1.xpose.msra.mxu0 0.0
    %671 = vmatprep.subr.mxu0 0.0
    %672 = vmatpush1.xpose.msra.mxu0 0.0
    %673 = vmatprep.subr.mxu0 0.0
    %674 = vmatpush1.xpose.msra.mxu0 0.0
    %675 = vmatprep.subr.mxu0 0.0
    %676 = vmatpush1.xpose.msra.mxu0 0.0
    %677 = vmatprep.subr.mxu0 0.0
    %678 = vmatpush1.xpose.msra.mxu0 0.0
    %679 = vmatprep.subr.mxu0 0.0
    %680 = vmatpush1.xpose.msra.mxu0 0.0
    %681 = vmatprep.subr.mxu0 0.0
    %682 = vmatpush1.xpose.msra.mxu0 0.0
    %683 = vmatprep.subr.mxu0 0.0
    %684 = vmatpush1.xpose.msra.mxu0 0.0
    %685 = vmatprep.subr.mxu0 0.0
    %686 = vmatpush1.xpose.msra.mxu0 0.0
    %687 = vmatprep.subr.mxu0 0.0
    %688 = vmatpush1.xpose.msra.mxu0 0.0
    %689 = vmatprep.subr.mxu0 0.0
    %690 = vmatpush1.xpose.msra.mxu0 0.0
    %691 = vmatprep.subr.mxu0 0.0
    %692 = vmatpush1.xpose.msra.mxu0 0.0
    %693 = vmatprep.subr.mxu0 0.0
    %694 = vmatpush1.xpose.msra.mxu0 0.0
    %695 = vmatprep.subr.mxu0 0.0
    %696 = vmatpush1.xpose.msra.mxu0 0.0
    %697 = vmatprep.subr.mxu0 0.0
    %698 = vmatpush1.xpose.msra.mxu0 0.0
    %699 = vmatprep.subr.mxu0 0.0
    %700 = vmatpush1.xpose.msra.mxu0 0.0
    %701 = vmatprep.subr.mxu0 0.0
    %702 = vmatpush1.xpose.msra.mxu0 0.0
    %703 = vmatprep.subr.mxu0 0.0
    %704 = vmatpush1.xpose.msra.mxu0 0.0
    %705 = vmatprep.subr.mxu0 0.0
    %706 = vmatpush1.xpose.msra.mxu0 0.0
    %707 = vmatprep.subr.mxu0 0.0
    %708 = vmatpush1.xpose.msra.mxu0 0.0
    %709 = vmatprep.subr.mxu0 0.0
    %710 = vmatpush1.xpose.msra.mxu0 0.0
    %711 = vmatprep.subr.mxu0 0.0
    %712 = vmatpush1.xpose.msra.mxu0 0.0
    %713 = vmatprep.subr.mxu0 0.0
    %714 = vmatpush1.xpose.msra.mxu0 0.0
    %715 = vmatprep.mubr.f32.mxu0 0.0
    %716 = vmatmul.mubr.f32.gmra.mrb[0].mxu0 %v625
    %v717 = vpop.f32.mrb[0].mxu0
    %v718 = vadd.f32 0.0, %v717
    %v719 = vpop.f32.mrb[0].mxu0
    %720 = vdwg.mxu0
    %v722 = vsel %vm227, %v135, 0
    %v725 = vsel %vm227, %v136, 0
    %v728 = vsel %vm227, %v137, 0
    %v731 = vsel %vm227, %v138, 0
    %v734 = vsel %vm227, %v139, 0
    %v737 = vsel %vm227, %v140, 0
    %v740 = vsel %vm227, %v141, 0
    %v743 = vsel %vm227, %v142, 0
    %745 = vmatprep.subr.mxu0 0.0
    %746 = vmatpush1.xpose.msra.mxu0 %v722
    %747 = vmatprep.subr.mxu0 0.0
    %748 = vmatpush1.xpose.msra.mxu0 %v725
    %749 = vmatprep.subr.mxu0 0.0
    %750 = vmatpush1.xpose.msra.mxu0 %v728
    %751 = vmatprep.subr.mxu0 0.0
    %752 = vmatpush1.xpose.msra.mxu0 %v731
    %753 = vmatprep.subr.mxu0 0.0
    %754 = vmatpush1.xpose.msra.mxu0 %v734
    %755 = vmatprep.subr.mxu0 0.0
    %756 = vmatpush1.xpose.msra.mxu0 %v737
    %757 = vmatprep.subr.mxu0 0.0
    %758 = vmatpush1.xpose.msra.mxu0 %v740
    %759 = vmatprep.subr.mxu0 0.0
    %760 = vmatpush1.xpose.msra.mxu0 %v743
    %761 = vmatprep.subr.mxu0 0.0
    %762 = vmatpush1.xpose.msra.mxu0 0.0
    %763 = vmatprep.subr.mxu0 0.0
    %764 = vmatpush1.xpose.msra.mxu0 0.0
    %765 = vmatprep.subr.mxu0 0.0
    %766 = vmatpush1.xpose.msra.mxu0 0.0
    %767 = vmatprep.subr.mxu0 0.0
    %768 = vmatpush1.xpose.msra.mxu0 0.0
    %769 = vmatprep.subr.mxu0 0.0
    %770 = vmatpush1.xpose.msra.mxu0 0.0
    %771 = vmatprep.subr.mxu0 0.0
    %772 = vmatpush1.xpose.msra.mxu0 0.0
    %773 = vmatprep.subr.mxu0 0.0
    %774 = vmatpush1.xpose.msra.mxu0 0.0
    %775 = vmatprep.subr.mxu0 0.0
    %776 = vmatpush1.xpose.msra.mxu0 0.0
    %777 = vmatprep.subr.mxu0 0.0
    %778 = vmatpush1.xpose.msra.mxu0 0.0
    %779 = vmatprep.subr.mxu0 0.0
    %780 = vmatpush1.xpose.msra.mxu0 0.0
    %781 = vmatprep.subr.mxu0 0.0
    %782 = vmatpush1.xpose.msra.mxu0 0.0
    %783 = vmatprep.subr.mxu0 0.0
    %784 = vmatpush1.xpose.msra.mxu0 0.0
    %785 = vmatprep.subr.mxu0 0.0
    %786 = vmatpush1.xpose.msra.mxu0 0.0
    %787 = vmatprep.subr.mxu0 0.0
    %788 = vmatpush1.xpose.msra.mxu0 0.0
    %789 = vmatprep.subr.mxu0 0.0
    %790 = vmatpush1.xpose.msra.mxu0 0.0
    %791 = vmatprep.subr.mxu0 0.0
    %792 = vmatpush1.xpose.msra.mxu0 0.0
    %793 = vmatprep.subr.mxu0 0.0
    %794 = vmatpush1.xpose.msra.mxu0 0.0
    %795 = vmatprep.subr.mxu0 0.0
    %796 = vmatpush1.xpose.msra.mxu0 0.0
    %797 = vmatprep.subr.mxu0 0.0
    %798 = vmatpush1.xpose.msra.mxu0 0.0
    %799 = vmatprep.subr.mxu0 0.0
    %800 = vmatpush1.xpose.msra.mxu0 0.0
    %801 = vmatprep.subr.mxu0 0.0
    %802 = vmatpush1.xpose.msra.mxu0 0.0
    %803 = vmatprep.subr.mxu0 0.0
    %804 = vmatpush1.xpose.msra.mxu0 0.0
    %805 = vmatprep.subr.mxu0 0.0
    %806 = vmatpush1.xpose.msra.mxu0 0.0
    %807 = vmatprep.subr.mxu0 0.0
    %808 = vmatpush1.xpose.msra.mxu0 0.0
    %809 = vmatprep.mubr.f32.mxu0 0.0
    %810 = vmatmul.mubr.f32.gmra.mrb[0].mxu0 %v625
    %v811 = vpop.f32.mrb[0].mxu0
    %v812 = vadd.f32 0.0, %v811
    %v813 = vpop.f32.mrb[0].mxu0
    %814 = vdwg.mxu0
    %815 = vst.msk [vmem:[#allocation2] sm:$0xff] %vm60, %v718
    %816 = vst.msk [vmem:[#allocation4] sm:$0xff] %vm60, %v812
    %817 = vst.msk [vmem:[#allocation6] sm:$0xff] %vm227, %v614
    %818 = vst.msk [vmem:[#allocation7] sm:$0xff] %vm227, %v617
    // Predicated region
    $region54: #{tpu_custom_call.1} parent=1 // pred_check
      _
    $region55: #{tpu_custom_call.1} parent=1 // pred_check_branch
      %820 = sbr.rel (0) target = $region57
    $region56: #{tpu_custom_call.1} parent=1 // pred_region
      %s822 = ssub.s32 128, 128
      %823 = vsyncadd [#allocation3], %s822
      %s825 = sshll.u32 [#allocation2], 4
      %s826 = int_to_ptr.vmem [resolvable:$true] %s825
      %828 = dma.vmem_to_hbm [thread:$0]  %s826, 128, %s13, [#allocation3]
    $region57: #{tpu_custom_call.1} parent=1 // pred_fallthru
      _
    // Predicated region
    $region58: #{tpu_custom_call.1} parent=1 // pred_check
      _
    $region59: #{tpu_custom_call.1} parent=1 // pred_check_branch
      %830 = sbr.rel (0) target = $region61
    $region60: #{tpu_custom_call.1} parent=1 // pred_region
      %s832 = ssub.s32 128, 128
      %833 = vsyncadd [#allocation5], %s832
      %s835 = sshll.u32 [#allocation4], 4
      %s836 = int_to_ptr.vmem [resolvable:$true] %s835
      %838 = dma.vmem_to_hbm [thread:$0]  %s836, 128, %s14, [#allocation5]
    $region61: #{tpu_custom_call.1} parent=1 // pred_fallthru
      _
    // Predicated region
    $region62: #{tpu_custom_call.1} parent=1 // pred_check
      _
    $region63: #{tpu_custom_call.1} parent=1 // pred_check_branch
      %840 = sbr.rel (0) target = $region65
    $region64: #{tpu_custom_call.1} parent=1 // pred_region
      %s842 = ssub.s32 128, 128
      %843 = vsyncadd [#allocation5], %s842
      %s845 = sshll.u32 [#allocation6], 4
      %s846 = int_to_ptr.vmem [resolvable:$true] %s845
      %848 = dma.vmem_to_hbm [thread:$0]  %s846, 128, %s15, [#allocation5]
    $region65: #{tpu_custom_call.1} parent=1 // pred_fallthru
      _
    // Predicated region
    $region66: #{tpu_custom_call.1} parent=1 // pred_check
      _
    $region67: #{tpu_custom_call.1} parent=1 // pred_check_branch
      %850 = sbr.rel (0) target = $region69
    $region68: #{tpu_custom_call.1} parent=1 // pred_region
      %s852 = ssub.s32 128, 128
      %853 = vsyncadd [#allocation8], %s852
      %s855 = sshll.u32 [#allocation7], 4
      %s856 = int_to_ptr.vmem [resolvable:$true] %s855
      %858 = dma.vmem_to_hbm [thread:$0]  %s856, 128, %s16, [#allocation8]
    $region69: #{tpu_custom_call.1} parent=1 // pred_fallthru
      _
    // Predicated region
    $region70: #{tpu_custom_call.1} parent=1 // pred_check
      _
    $region71: #{tpu_custom_call.1} parent=1 // pred_check_branch
      %860 = sbr.rel (0) target = $region73
    $region72: #{tpu_custom_call.1} parent=1 // pred_region
      %861 = dma.done [#allocation3], 128
    $region73: #{tpu_custom_call.1} parent=1 // pred_fallthru
      _
    // Predicated region
    $region74: #{tpu_custom_call.1} parent=1 // pred_check
      _
    $region75: #{tpu_custom_call.1} parent=1 // pred_check_branch
      %863 = sbr.rel (0) target = $region77
    $region76: #{tpu_custom_call.1} parent=1 // pred_region
      %864 = dma.done [#allocation5], 128
    $region77: #{tpu_custom_call.1} parent=1 // pred_fallthru
      _
    // Predicated region
    $region78: #{tpu_custom_call.1} parent=1 // pred_check
      _
    $region79: #{tpu_custom_call.1} parent=1 // pred_check_branch
      %866 = sbr.rel (0) target = $region81
    $region80: #{tpu_custom_call.1} parent=1 // pred_region
      %867 = dma.done [#allocation5], 128
    $region81: #{tpu_custom_call.1} parent=1 // pred_fallthru
      _
    // Predicated region
    $region82: #{tpu_custom_call.1} parent=1 // pred_check
      _
    $region83: #{tpu_custom_call.1} parent=1 // pred_check_branch
      %869 = sbr.rel (0) target = $region85
    $region84: #{tpu_custom_call.1} parent=1 // pred_region
      %870 = dma.done [#allocation8], 128
    $region85: #{tpu_custom_call.1} parent=1 // pred_fallthru
      _
    %871 = vsyncpa [#allocation3], 1
    %872 = vsyncpa [#allocation5], 1
    %873 = vsyncpa [#allocation8], 1

</llo_original>
